<compile_context>
chip_gen: v7x
topology: tpu7x:2x2x1
jax: 0.10.0
libtpu: 0.0.40
codegen_flags: <defaults>
</compile_context>

<pallas_src>
import jax
import jax.numpy as jnp
from jax.experimental import pallas as pl
from jax.experimental.pallas import tpu as pltpu

HIDDEN = 128


def _round_up(x, m):
    return ((x + m - 1) // m) * m


def actor_kernel(x_ref, w1_ref, b1_ref, w2_ref, b2_ref, w3_ref, b3_ref, o_ref):
    """One batch tile of the full network: two ReLU Linears + tanh Linear.

    x_ref:  (TM, S)     f32 or bf16 (cast to bf16 for the MXU if needed)
    w*_ref: (in, out)   bf16        (VMEM-resident across all grid steps)
    b*_ref: (1, out)    f32
    o_ref:  (TM, A)     f32         (true action width; block last dim == full dim)
    """
    x = x_ref[...]
    if x.dtype != jnp.bfloat16:
        x = x.astype(jnp.bfloat16)

    # fc1 + relu  (bf16 operands, f32 accumulate / bias / activation)
    h1 = jnp.dot(x, w1_ref[...], preferred_element_type=jnp.float32) + b1_ref[...]
    h1 = jnp.maximum(h1, 0.0).astype(jnp.bfloat16)

    # fc2 + relu
    h2 = jnp.dot(h1, w2_ref[...], preferred_element_type=jnp.float32) + b2_ref[...]
    h2 = jnp.maximum(h2, 0.0).astype(jnp.bfloat16)

    # fc3 + tanh (f32 epilogue, true-width store)
    h3 = jnp.dot(h2, w3_ref[...], preferred_element_type=jnp.float32) + b3_ref[...]
    o_ref[...] = jnp.tanh(h3).astype(o_ref.dtype)


def actor_forward(state, params, *, tile_m=1024, min_tiles=2):
    """state: [B, state_size] float32 (or bfloat16). params: dict of (w1,b1,w2,b2,w3,b3).

    Weights are stored [in_features, out_features] (transposed vs. PyTorch), so the
    kernel computes y = x @ W + b directly on the MXU.
    """
    B, S = state.shape
    H = params["w1"].shape[1]
    A = params["w3"].shape[1]

    # --- Balanced batch tiling ------------------------------------------------
    # n_tiles first (so padding stays <= 7 rows per tile), then tile size.
    n_tiles = pl.cdiv(B, tile_m)
    # v7x has 2 TensorCores sharding the "parallel" grid axis: keep >= min_tiles
    # tiles whenever the batch is large enough that the extra padding is negligible.
    if B >= min_tiles * 8:
        n_tiles = max(n_tiles, min_tiles)
    TM = _round_up(pl.cdiv(B, n_tiles), 8)
    B_pad = n_tiles * TM
    if B_pad != B:
        state = jnp.pad(state, ((0, B_pad - B), (0, 0)))

    # --- bf16 matmul operands at the pallas_call boundary (halves weight DMA,
    # native MXU dtype); biases stay f32 for the f32 epilogue math.
    w1 = params["w1"].astype(jnp.bfloat16)
    w2 = params["w2"].astype(jnp.bfloat16)
    w3 = params["w3"].astype(jnp.bfloat16)
    b1 = params["b1"].astype(jnp.float32)
    b2 = params["b2"].astype(jnp.float32)
    b3 = params["b3"].astype(jnp.float32)

    resident = lambda shape: pl.BlockSpec(shape, lambda i: (0,) * len(shape))

    x_bytes = state.dtype.itemsize
    cost = pl.CostEstimate(
        flops=2 * B_pad * (S * H + H * H + H * A),
        transcendentals=B_pad * A,  # tanh
        bytes_accessed=(
            B_pad * S * x_bytes                # x in
            + (S * H + H * H + H * A) * 2      # bf16 weights
            + (H + H + A) * 4                  # f32 biases
            + B_pad * A * 4                    # f32 out (true width)
        ),
    )

    out = pl.pallas_call(
        actor_kernel,
        out_shape=jax.ShapeDtypeStruct((B_pad, A), jnp.float32),
        grid=(n_tiles,),
        in_specs=[
            pl.BlockSpec((TM, S), lambda i: (i, 0)),   # x: tiled over batch
            resident((S, H)),                          # w1 (VMEM-resident)
            resident((1, H)),                          # b1
            resident((H, H)),                          # w2
            resident((1, H)),                          # b2
            resident((H, A)),                          # w3
            resident((1, A)),                          # b3
        ],
        out_specs=pl.BlockSpec((TM, A), lambda i: (i, 0)),  # true-width output
        compiler_params=pltpu.CompilerParams(
            dimension_semantics=("parallel",),
        ),
        cost_estimate=cost,
    )(state, w1, b1, w2, b2, w3, b3)

    return out[:B] if B_pad != B else out


def init_actor_params(key, state_size, action_size):
    """Deterministic init matching the PyTorch module.
    reset_parameters(): all three weights ~ U(-0.003, 0.003) (as written in the spec);
    biases keep the PyTorch Linear default U(-1/sqrt(fan_in), 1/sqrt(fan_in)).
    Weights stored as [in, out] (transposed from PyTorch's [out, in])."""
    k1, k2, k3, k4, k5, k6 = jax.random.split(key, 6)
    lim = 0.003

    w1 = jax.random.uniform(k1, (state_size, HIDDEN), jnp.float32, -lim, lim)
    b1 = jax.random.uniform(k2, (1, HIDDEN), jnp.float32,
                            -1.0 / jnp.sqrt(state_size), 1.0 / jnp.sqrt(state_size))
    w2 = jax.random.uniform(k3, (HIDDEN, HIDDEN), jnp.float32, -lim, lim)
    b2 = jax.random.uniform(k4, (1, HIDDEN), jnp.float32,
                            -1.0 / jnp.sqrt(HIDDEN), 1.0 / jnp.sqrt(HIDDEN))
    w3 = jax.random.uniform(k5, (HIDDEN, action_size), jnp.float32, -lim, lim)
    b3 = jax.random.uniform(k6, (1, action_size), jnp.float32,
                            -1.0 / jnp.sqrt(HIDDEN), 1.0 / jnp.sqrt(HIDDEN))
    return {"w1": w1, "b1": b1, "w2": w2, "b2": b2, "w3": w3, "b3": b3}


def actor_ref_bf16(state, params):
    """Pure-JAX reference with the same bf16-operand / f32-accumulate precision
    as the kernel."""
    x = state.astype(jnp.bfloat16)
    w1 = params["w1"].astype(jnp.bfloat16)
    w2 = params["w2"].astype(jnp.bfloat16)
    w3 = params["w3"].astype(jnp.bfloat16)
    h1 = jnp.maximum(
        jnp.dot(x, w1, preferred_element_type=jnp.float32) + params["b1"], 0.0
    ).astype(jnp.bfloat16)
    h2 = jnp.maximum(
        jnp.dot(h1, w2, preferred_element_type=jnp.float32) + params["b2"], 0.0
    ).astype(jnp.bfloat16)
    return jnp.tanh(jnp.dot(h2, w3, preferred_element_type=jnp.float32) + params["b3"])


def actor_ref_f32(state, params):
    """Full-precision reference (for a loose sanity check)."""
    h1 = jnp.maximum(state @ params["w1"] + params["b1"], 0.0)
    h2 = jnp.maximum(h1 @ params["w2"] + params["b2"], 0.0)
    return jnp.tanh(h2 @ params["w3"] + params["b3"])


if __name__ == "__main__":
    key = jax.random.PRNGKey(0)
    k_state, k_params = jax.random.split(key)

    batch = 8
    state_size = 32
    action_size = 4

    state = jax.random.normal(k_state, (batch, state_size), jnp.float32)
    params = init_actor_params(k_params, state_size, action_size)

    out = actor_forward(state, params)
    jax.block_until_ready(out)
    assert out.shape == (batch, action_size)

    # Tight check against a reference with matching (bf16 matmul, f32 accum) precision.
    ref_bf16 = actor_ref_bf16(state, params)
    assert jnp.allclose(out, ref_bf16, atol=1e-4, rtol=1e-3), "mismatch vs bf16-precision reference"

    # Loose check against the full-f32 reference (bf16 operand rounding only).
    ref_f32 = actor_ref_f32(state, params)
    assert jnp.allclose(out, ref_f32, atol=5e-3, rtol=5e-2), "mismatch vs f32 reference"

    # Also exercise an odd/large-ish batch to cover the multi-tile + padding path.
    big_state = jax.random.normal(k_state, (1037, state_size), jnp.float32)
    big_out = actor_forward(big_state, params)
    jax.block_until_ready(big_out)
    assert big_out.shape == (1037, action_size)
    assert jnp.allclose(big_out, actor_ref_bf16(big_state, params), atol=1e-4, rtol=1e-3)

    print("KERNEL_OK")
</pallas_src>

<mosaic_0001>
module attributes {stable_mosaic.version = 11 : i64} {
  func.func @actor_kernel(%arg0: i32, %arg1: memref<8x32xf32, #tpu.memory_space<vmem>>, %arg2: memref<32x128xbf16, #tpu.memory_space<vmem>>, %arg3: memref<1x128xf32, #tpu.memory_space<vmem>>, %arg4: memref<128x128xbf16, #tpu.memory_space<vmem>>, %arg5: memref<1x128xf32, #tpu.memory_space<vmem>>, %arg6: memref<128x4xbf16, #tpu.memory_space<vmem>>, %arg7: memref<1x4xf32, #tpu.memory_space<vmem>>, %arg8: memref<8x4xf32, #tpu.memory_space<vmem>>) attributes {dimension_semantics = [#tpu.dimension_semantics<parallel>], iteration_bounds = array<i64: 1>, scalar_prefetch = 0 : i64, scratch_operands = 0 : i64, tpu.core_type = #tpu.core_type<tc>, window_params = [{transform_indices = @transform_0, window_bounds = array<i64: 8, 32>}, {pipeline_mode = #tpu.pipeline_mode<synchronous>, transform_indices = @transform_1, window_bounds = array<i64: 32, 128>}, {pipeline_mode = #tpu.pipeline_mode<synchronous>, transform_indices = @transform_2, window_bounds = array<i64: 1, 128>}, {pipeline_mode = #tpu.pipeline_mode<synchronous>, transform_indices = @transform_3, window_bounds = array<i64: 128, 128>}, {pipeline_mode = #tpu.pipeline_mode<synchronous>, transform_indices = @transform_4, window_bounds = array<i64: 1, 128>}, {pipeline_mode = #tpu.pipeline_mode<synchronous>, transform_indices = @transform_5, window_bounds = array<i64: 128, 4>}, {pipeline_mode = #tpu.pipeline_mode<synchronous>, transform_indices = @transform_6, window_bounds = array<i64: 1, 4>}, {transform_indices = @transform_7, window_bounds = array<i64: 8, 4>}]} {
    %c0 = arith.constant 0 : index
    %c0_0 = arith.constant 0 : index
    %0 = vector.load %arg1[%c0, %c0_0] : memref<8x32xf32, #tpu.memory_space<vmem>>, vector<8x32xf32>
    %1 = arith.truncf %0 : vector<8x32xf32> to vector<8x32xbf16>
    %c0_1 = arith.constant 0 : index
    %c0_2 = arith.constant 0 : index
    %2 = vector.load %arg2[%c0_1, %c0_2] : memref<32x128xbf16, #tpu.memory_space<vmem>>, vector<32x128xbf16>
    %cst = arith.constant dense<0.000000e+00> : vector<8x128xf32>
    %3 = tpu.matmul %1, %2, %cst {dimension_numbers = #tpu.dot_dimension_numbers<[1], [0], [0], [1], [0, 0, 1, 1], [], []>} : vector<8x32xbf16>, vector<32x128xbf16>, vector<8x128xf32> -> vector<8x128xf32>
    %c0_3 = arith.constant 0 : index
    %c0_4 = arith.constant 0 : index
    %4 = vector.load %arg3[%c0_3, %c0_4] : memref<1x128xf32, #tpu.memory_space<vmem>>, vector<1x128xf32>
    %5 = vector.broadcast %4 : vector<1x128xf32> to vector<8x128xf32>
    %6 = arith.addf %3, %5 : vector<8x128xf32>
    %cst_5 = arith.constant 0.000000e+00 : f32
    %7 = vector.broadcast %cst_5 : f32 to vector<8x128xf32>
    %8 = arith.maximumf %6, %7 : vector<8x128xf32>
    %9 = arith.truncf %8 : vector<8x128xf32> to vector<8x128xbf16>
    %c0_6 = arith.constant 0 : index
    %c0_7 = arith.constant 0 : index
    %10 = vector.load %arg4[%c0_6, %c0_7] : memref<128x128xbf16, #tpu.memory_space<vmem>>, vector<128x128xbf16>
    %cst_8 = arith.constant dense<0.000000e+00> : vector<8x128xf32>
    %11 = tpu.matmul %9, %10, %cst_8 {dimension_numbers = #tpu.dot_dimension_numbers<[1], [0], [0], [1], [0, 0, 1, 1], [], []>} : vector<8x128xbf16>, vector<128x128xbf16>, vector<8x128xf32> -> vector<8x128xf32>
    %c0_9 = arith.constant 0 : index
    %c0_10 = arith.constant 0 : index
    %12 = vector.load %arg5[%c0_9, %c0_10] : memref<1x128xf32, #tpu.memory_space<vmem>>, vector<1x128xf32>
    %13 = vector.broadcast %12 : vector<1x128xf32> to vector<8x128xf32>
    %14 = arith.addf %11, %13 : vector<8x128xf32>
    %cst_11 = arith.constant 0.000000e+00 : f32
    %15 = vector.broadcast %cst_11 : f32 to vector<8x128xf32>
    %16 = arith.maximumf %14, %15 : vector<8x128xf32>
    %17 = arith.truncf %16 : vector<8x128xf32> to vector<8x128xbf16>
    %c0_12 = arith.constant 0 : index
    %c0_13 = arith.constant 0 : index
    %18 = vector.load %arg6[%c0_12, %c0_13] : memref<128x4xbf16, #tpu.memory_space<vmem>>, vector<128x4xbf16>
    %cst_14 = arith.constant dense<0.000000e+00> : vector<8x4xf32>
    %19 = tpu.matmul %17, %18, %cst_14 {dimension_numbers = #tpu.dot_dimension_numbers<[1], [0], [0], [1], [0, 0, 1, 1], [], []>} : vector<8x128xbf16>, vector<128x4xbf16>, vector<8x4xf32> -> vector<8x4xf32>
    %c0_15 = arith.constant 0 : index
    %c0_16 = arith.constant 0 : index
    %20 = vector.load %arg7[%c0_15, %c0_16] : memref<1x4xf32, #tpu.memory_space<vmem>>, vector<1x4xf32>
    %21 = vector.broadcast %20 : vector<1x4xf32> to vector<8x4xf32>
    %22 = arith.addf %19, %21 : vector<8x4xf32>
    %23 = math.tanh %22 : vector<8x4xf32>
    %c0_17 = arith.constant 0 : index
    %c0_18 = arith.constant 0 : index
    %24 = vector.load %arg8[%c0_17, %c0_18] : memref<8x4xf32, #tpu.memory_space<vmem>>, vector<8x4xf32>
    tpu.vector_store %arg8[%c0_17, %c0_18], %23 {strides = array<i32>} : memref<8x4xf32, #tpu.memory_space<vmem>>, vector<8x4xf32>,
    return
  }
  func.func @transform_0(%arg0: i32) -> (i32, i32) {
    %c0_i32 = arith.constant 0 : i32
    %c0_i32_0 = arith.constant 0 : i32
    return %arg0, %c0_i32 : i32, i32
  }
  func.func @transform_1(%arg0: i32) -> (i32, i32) {
    %c0_i32 = arith.constant 0 : i32
    %c0_i32_0 = arith.constant 0 : i32
    %c0_i32_1 = arith.constant 0 : i32
    return %c0_i32, %c0_i32_0 : i32, i32
  }
  func.func @transform_2(%arg0: i32) -> (i32, i32) {
    %c0_i32 = arith.constant 0 : i32
    %c0_i32_0 = arith.constant 0 : i32
    %c0_i32_1 = arith.constant 0 : i32
    return %c0_i32, %c0_i32_0 : i32, i32
  }
  func.func @transform_3(%arg0: i32) -> (i32, i32) {
    %c0_i32 = arith.constant 0 : i32
    %c0_i32_0 = arith.constant 0 : i32
    %c0_i32_1 = arith.constant 0 : i32
    return %c0_i32, %c0_i32_0 : i32, i32
  }
  func.func @transform_4(%arg0: i32) -> (i32, i32) {
    %c0_i32 = arith.constant 0 : i32
    %c0_i32_0 = arith.constant 0 : i32
    %c0_i32_1 = arith.constant 0 : i32
    return %c0_i32, %c0_i32_0 : i32, i32
  }
  func.func @transform_5(%arg0: i32) -> (i32, i32) {
    %c0_i32 = arith.constant 0 : i32
    %c0_i32_0 = arith.constant 0 : i32
    %c0_i32_1 = arith.constant 0 : i32
    return %c0_i32, %c0_i32_0 : i32, i32
  }
  func.func @transform_6(%arg0: i32) -> (i32, i32) {
    %c0_i32 = arith.constant 0 : i32
    %c0_i32_0 = arith.constant 0 : i32
    %c0_i32_1 = arith.constant 0 : i32
    return %c0_i32, %c0_i32_0 : i32, i32
  }
  func.func @transform_7(%arg0: i32) -> (i32, i32) {
    %c0_i32 = arith.constant 0 : i32
    %c0_i32_0 = arith.constant 0 : i32
    return %arg0, %c0_i32 : i32, i32
  }
}

</mosaic_0001>

<llo_original>
// kernel: tpu_custom_call.1
$region0: #{tpu_custom_call.1}
  #allocation0 [shape = 'u32[]', space=smem, size = 0x4, offset = 0x4, fixed_abs, tag = 'smem constant byte address 0x4 - core index']
  #allocation1 [shape = 'u32[144,128]{1,0:T(1,128)}', space=vmem, size = 0x12000, scoped, tag = 'internal scratch']
  %s0 = inlined_call_operand.vmem [shape: f32[8,32], index: 0, kind: input, shape index: {}]
  %s1 = inlined_call_operand.hbm [shape: bf16[32,128], index: 1, kind: input, shape index: {}]
  %s2 = inlined_call_operand.vmem [shape: f32[1,128], index: 2, kind: input, shape index: {}]
  %s3 = inlined_call_operand.vmem [shape: bf16[128,128], index: 3, kind: input, shape index: {}]
  %s4 = inlined_call_operand.vmem [shape: f32[1,128], index: 4, kind: input, shape index: {}]
  %s5 = inlined_call_operand.vmem [shape: bf16[128,4], index: 5, kind: input, shape index: {}]
  %s6 = inlined_call_operand.vmem [shape: f32[1,4], index: 6, kind: input, shape index: {}]
  %s7 = inlined_call_operand.vmem [shape: f32[8,4], index: 7, kind: output, shape index: {}]
  %s8 = sld [smem:[#allocation0]]
  $region42: #{tpu_custom_call.1} parent=0
    _
  %s10 = ssub.s32 1, %s8
  %s11 = scalar_select 0, %s10, %s8
  $region1: #{tpu_custom_call.1} parent=0
    #allocation2 [shape = 'u8[8192]{0}', space=vmem, size = 0x2000, scoped, tag = 'input window, operand 1, single buffered']
    #allocation3 [shape = 's32[1]{0}', space=sflag, size = 0x4, scoped, tag = 'scoped memory for tpu_custom_call.1']
    %12 = vsyncpa [#allocation3], 0
    // Predicated region
    $region2: #{tpu_custom_call.1} parent=1 // pred_check
      _
    $region3: #{tpu_custom_call.1} parent=1 // pred_check_branch
      %14 = sbr.rel (0) target = $region5
    $region4: #{tpu_custom_call.1} parent=1 // pred_region
      _
    $region5: #{tpu_custom_call.1} parent=1 // pred_fallthru
      _
    // Predicated region
    $region6: #{tpu_custom_call.1} parent=1 // pred_check
      _
    $region7: #{tpu_custom_call.1} parent=1 // pred_check_branch
      %16 = sbr.rel (0) target = $region9
    $region8: #{tpu_custom_call.1} parent=1 // pred_region
      %s18 = ssub.s32 256, 256
      %19 = vsyncadd [#allocation3], %s18
      %s20 = sshll.u32 [#allocation2], 4
      %s21 = int_to_ptr.vmem [resolvable:$true] %s20
      %26 = dma.hbm_to_vmem [thread:$0]  %s1, 256, %s21, [#allocation3], 64, 64, 4
    $region9: #{tpu_custom_call.1} parent=1 // pred_fallthru
      _
    // Predicated region
    $region10: #{tpu_custom_call.1} parent=1 // pred_check
      _
    $region11: #{tpu_custom_call.1} parent=1 // pred_check_branch
      %28 = sbr.rel (0) target = $region13
    $region12: #{tpu_custom_call.1} parent=1 // pred_region
      _
    $region13: #{tpu_custom_call.1} parent=1 // pred_fallthru
      _
    // Predicated region
    $region14: #{tpu_custom_call.1} parent=1 // pred_check
      _
    $region15: #{tpu_custom_call.1} parent=1 // pred_check_branch
      %30 = sbr.rel (0) target = $region17
    $region16: #{tpu_custom_call.1} parent=1 // pred_region
      _
    $region17: #{tpu_custom_call.1} parent=1 // pred_fallthru
      _
    // Predicated region
    $region18: #{tpu_custom_call.1} parent=1 // pred_check
      _
    $region19: #{tpu_custom_call.1} parent=1 // pred_check_branch
      %32 = sbr.rel (0) target = $region21
    $region20: #{tpu_custom_call.1} parent=1 // pred_region
      _
    $region21: #{tpu_custom_call.1} parent=1 // pred_fallthru
      _
    // Predicated region
    $region22: #{tpu_custom_call.1} parent=1 // pred_check
      _
    $region23: #{tpu_custom_call.1} parent=1 // pred_check_branch
      %34 = sbr.rel (0) target = $region25
    $region24: #{tpu_custom_call.1} parent=1 // pred_region
      _
    $region25: #{tpu_custom_call.1} parent=1 // pred_fallthru
      _
    // Predicated region
    $region26: #{tpu_custom_call.1} parent=1 // pred_check
      _
    $region27: #{tpu_custom_call.1} parent=1 // pred_check_branch
      %36 = sbr.rel (0) target = $region29
    $region28: #{tpu_custom_call.1} parent=1 // pred_region
      _
    $region29: #{tpu_custom_call.1} parent=1 // pred_fallthru
      _
    // Predicated region
    $region30: #{tpu_custom_call.1} parent=1 // pred_check
      _
    $region31: #{tpu_custom_call.1} parent=1 // pred_check_branch
      %38 = sbr.rel (0) target = $region33
    $region32: #{tpu_custom_call.1} parent=1 // pred_region
      %39 = dma.done [#allocation3], 256
    $region33: #{tpu_custom_call.1} parent=1 // pred_fallthru
      _
    %v41 = vld [vmem:[%s0] sm:$0xff]
    %v42 = vpack.c.bf16 %v41, %v41
    %v43 = vld [vmem:[#allocation2] sm:$0xf]
    %v44 = vld [vmem:[#allocation2 + $0x4] sm:$0xf]
    %v45 = vld [vmem:[#allocation2 + $0x8] sm:$0xf]
    %v46 = vld [vmem:[#allocation2 + $0xc] sm:$0xf]
    %v47 = vld [vmem:[%s2] sm:$0x1]
    %v49 = vlaneseq
    %v50 = vshrl.u32 %v49, 7
    %v51 = vsub.s32 0, %v50
    %v52 = vrot.slane %v47, %v51
    %v58 = vunpack.c.l.b16 %v43
    %v59 = vunpack.c.l.b16 %v44
    %v60 = vunpack.c.l.b16 %v45
    %v61 = vunpack.c.l.b16 %v46
    %v62 = vpack.c.b16 %v59, %v58
    %v63 = vpack.c.b16 %v61, %v60
    %vm66 = vcmask 261120
    %v68 = vsel %vm66, %v42, 0
    %70 = vmatprep.subr.bf16.mxu0 0
    %71 = vmatpush1.bf16.msra.mxu0 %v62
    %72 = vmatprep.subr.bf16.mxu0 0
    %73 = vmatpush1.bf16.msra.mxu0 %v63
    %74 = vmatprep.subr.bf16.mxu0 0
    %75 = vmatpush1.bf16.msra.mxu0 0
    %76 = vmatprep.subr.bf16.mxu0 0
    %77 = vmatpush1.bf16.msra.mxu0 0
    %78 = vmatprep.subr.bf16.mxu0 0
    %79 = vmatpush1.bf16.msra.mxu0 0
    %80 = vmatprep.subr.bf16.mxu0 0
    %81 = vmatpush1.bf16.msra.mxu0 0
    %82 = vmatprep.subr.bf16.mxu0 0
    %83 = vmatpush1.bf16.msra.mxu0 0
    %84 = vmatprep.subr.bf16.mxu0 0
    %85 = vmatpush1.bf16.msra.mxu0 0
    %86 = vmatprep.subr.bf16.mxu0 0
    %87 = vmatpush1.bf16.msra.mxu0 0
    %88 = vmatprep.subr.bf16.mxu0 0
    %89 = vmatpush1.bf16.msra.mxu0 0
    %90 = vmatprep.subr.bf16.mxu0 0
    %91 = vmatpush1.bf16.msra.mxu0 0
    %92 = vmatprep.subr.bf16.mxu0 0
    %93 = vmatpush1.bf16.msra.mxu0 0
    %94 = vmatprep.subr.bf16.mxu0 0
    %95 = vmatpush1.bf16.msra.mxu0 0
    %96 = vmatprep.subr.bf16.mxu0 0
    %97 = vmatpush1.bf16.msra.mxu0 0
    %98 = vmatprep.subr.bf16.mxu0 0
    %99 = vmatpush1.bf16.msra.mxu0 0
    %100 = vmatprep.subr.bf16.mxu0 0
    %101 = vmatpush1.bf16.msra.mxu0 0
    %102 = vmatprep.mubr.bf16.mxu0 0
    %103 = vmatmul.mubr.bf16.gmra.mrb[0].mxu0 %v68
    %v104 = vpop.f32.mrb[0].mxu0
    %v105 = vadd.f32 %v52, %v104
    %v106 = vpop.f32.mrb[0].mxu0
    %v107 = vpop.f32.mrb[0].mxu0
    %v108 = vpop.f32.mrb[0].mxu0
    %109 = vdwg.mxu0
    %v110 = vmax.f32 %v105, 0.0
    %v111 = vpack.c.bf16 %v110, %v110
    %v112 = vld [vmem:[%s3] sm:$0xf]
    %v113 = vld [vmem:[%s3 + $0x4] sm:$0xf]
    %v114 = vld [vmem:[%s3 + $0x8] sm:$0xf]
    %v115 = vld [vmem:[%s3 + $0xc] sm:$0xf]
    %v116 = vld [vmem:[%s3 + $0x10] sm:$0xf]
    %v117 = vld [vmem:[%s3 + $0x14] sm:$0xf]
    %v118 = vld [vmem:[%s3 + $0x18] sm:$0xf]
    %v119 = vld [vmem:[%s3 + $0x1c] sm:$0xf]
    %v120 = vld [vmem:[%s3 + $0x20] sm:$0xf]
    %v121 = vld [vmem:[%s3 + $0x24] sm:$0xf]
    %v122 = vld [vmem:[%s3 + $0x28] sm:$0xf]
    %v123 = vld [vmem:[%s3 + $0x2c] sm:$0xf]
    %v124 = vld [vmem:[%s3 + $0x30] sm:$0xf]
    %v125 = vld [vmem:[%s3 + $0x34] sm:$0xf]
    %v126 = vld [vmem:[%s3 + $0x38] sm:$0xf]
    %v127 = vld [vmem:[%s3 + $0x3c] sm:$0xf]
    %v128 = vld [vmem:[%s4] sm:$0x1]
    %v130 = vlaneseq
    %v131 = vshrl.u32 %v130, 7
    %v132 = vsub.s32 0, %v131
    %v133 = vrot.slane %v128, %v132
    %v151 = vunpack.c.l.b16 %v112
    %v152 = vunpack.c.l.b16 %v113
    %v153 = vunpack.c.l.b16 %v114
    %v154 = vunpack.c.l.b16 %v115
    %v155 = vunpack.c.l.b16 %v116
    %v156 = vunpack.c.l.b16 %v117
    %v157 = vunpack.c.l.b16 %v118
    %v158 = vunpack.c.l.b16 %v119
    %v159 = vunpack.c.l.b16 %v120
    %v160 = vunpack.c.l.b16 %v121
    %v161 = vunpack.c.l.b16 %v122
    %v162 = vunpack.c.l.b16 %v123
    %v163 = vunpack.c.l.b16 %v124
    %v164 = vunpack.c.l.b16 %v125
    %v165 = vunpack.c.l.b16 %v126
    %v166 = vunpack.c.l.b16 %v127
    %v167 = vpack.c.b16 %v152, %v151
    %v168 = vpack.c.b16 %v154, %v153
    %v169 = vpack.c.b16 %v156, %v155
    %v170 = vpack.c.b16 %v158, %v157
    %v171 = vpack.c.b16 %v160, %v159
    %v172 = vpack.c.b16 %v162, %v161
    %v173 = vpack.c.b16 %v164, %v163
    %v174 = vpack.c.b16 %v166, %v165
    %183 = vmatprep.subr.bf16.mxu0 0
    %184 = vmatpush1.bf16.msra.mxu0 %v167
    %185 = vmatprep.subr.bf16.mxu0 0
    %186 = vmatpush1.bf16.msra.mxu0 %v168
    %187 = vmatprep.subr.bf16.mxu0 0
    %188 = vmatpush1.bf16.msra.mxu0 %v169
    %189 = vmatprep.subr.bf16.mxu0 0
    %190 = vmatpush1.bf16.msra.mxu0 %v170
    %191 = vmatprep.subr.bf16.mxu0 0
    %192 = vmatpush1.bf16.msra.mxu0 %v171
    %193 = vmatprep.subr.bf16.mxu0 0
    %194 = vmatpush1.bf16.msra.mxu0 %v172
    %195 = vmatprep.subr.bf16.mxu0 0
    %196 = vmatpush1.bf16.msra.mxu0 %v173
    %197 = vmatprep.subr.bf16.mxu0 0
    %198 = vmatpush1.bf16.msra.mxu0 %v174
    %199 = vmatprep.subr.bf16.mxu0 0
    %200 = vmatpush1.bf16.msra.mxu0 0
    %201 = vmatprep.subr.bf16.mxu0 0
    %202 = vmatpush1.bf16.msra.mxu0 0
    %203 = vmatprep.subr.bf16.mxu0 0
    %204 = vmatpush1.bf16.msra.mxu0 0
    %205 = vmatprep.subr.bf16.mxu0 0
    %206 = vmatpush1.bf16.msra.mxu0 0
    %207 = vmatprep.subr.bf16.mxu0 0
    %208 = vmatpush1.bf16.msra.mxu0 0
    %209 = vmatprep.subr.bf16.mxu0 0
    %210 = vmatpush1.bf16.msra.mxu0 0
    %211 = vmatprep.subr.bf16.mxu0 0
    %212 = vmatpush1.bf16.msra.mxu0 0
    %213 = vmatprep.subr.bf16.mxu0 0
    %214 = vmatpush1.bf16.msra.mxu0 0
    %215 = vmatprep.mubr.bf16.mxu0 0
    %216 = vmatmul.mubr.bf16.gmra.mrb[0].mxu0 %v111
    %v217 = vpop.f32.mrb[0].mxu0
    %v218 = vadd.f32 %v133, %v217
    %v219 = vpop.f32.mrb[0].mxu0
    %v220 = vpop.f32.mrb[0].mxu0
    %v221 = vpop.f32.mrb[0].mxu0
    %222 = vdwg.mxu0
    %v223 = vmax.f32 %v218, 0.0
    %v224 = vpack.c.bf16 %v223, %v223
    %v225 = vld [vmem:[%s5] sm:$0xf]
    %v226 = vld [vmem:[%s5 + $0x4] sm:$0xf]
    %v227 = vld [vmem:[%s5 + $0x8] sm:$0xf]
    %v228 = vld [vmem:[%s5 + $0xc] sm:$0xf]
    %v229 = vld [vmem:[%s5 + $0x10] sm:$0xf]
    %v230 = vld [vmem:[%s5 + $0x14] sm:$0xf]
    %v231 = vld [vmem:[%s5 + $0x18] sm:$0xf]
    %v232 = vld [vmem:[%s5 + $0x1c] sm:$0xf]
    %v233 = vld [vmem:[%s5 + $0x20] sm:$0xf]
    %v234 = vld [vmem:[%s5 + $0x24] sm:$0xf]
    %v235 = vld [vmem:[%s5 + $0x28] sm:$0xf]
    %v236 = vld [vmem:[%s5 + $0x2c] sm:$0xf]
    %v237 = vld [vmem:[%s5 + $0x30] sm:$0xf]
    %v238 = vld [vmem:[%s5 + $0x34] sm:$0xf]
    %v239 = vld [vmem:[%s5 + $0x38] sm:$0xf]
    %v240 = vld [vmem:[%s5 + $0x3c] sm:$0xf]
    %v241 = vld [vmem:[%s6] sm:$0x1]
    %v243 = vlaneseq
    %v244 = vshrl.u32 %v243, 7
    %v245 = vsub.s32 0, %v244
    %v246 = vrot.slane %v241, %v245
    %v264 = vunpack.c.l.b16 %v225
    %v265 = vunpack.c.l.b16 %v226
    %v266 = vunpack.c.l.b16 %v227
    %v267 = vunpack.c.l.b16 %v228
    %v268 = vunpack.c.l.b16 %v229
    %v269 = vunpack.c.l.b16 %v230
    %v270 = vunpack.c.l.b16 %v231
    %v271 = vunpack.c.l.b16 %v232
    %v272 = vunpack.c.l.b16 %v233
    %v273 = vunpack.c.l.b16 %v234
    %v274 = vunpack.c.l.b16 %v235
    %v275 = vunpack.c.l.b16 %v236
    %v276 = vunpack.c.l.b16 %v237
    %v277 = vunpack.c.l.b16 %v238
    %v278 = vunpack.c.l.b16 %v239
    %v279 = vunpack.c.l.b16 %v240
    %v280 = vpack.c.b16 %v265, %v264
    %v281 = vpack.c.b16 %v267, %v266
    %v282 = vpack.c.b16 %v269, %v268
    %v283 = vpack.c.b16 %v271, %v270
    %v284 = vpack.c.b16 %v273, %v272
    %v285 = vpack.c.b16 %v275, %v274
    %v286 = vpack.c.b16 %v277, %v276
    %v287 = vpack.c.b16 %v279, %v278
    %296 = vmatprep.subr.bf16.mxu0 0
    %297 = vmatpush1.bf16.msra.mxu0 %v280
    %298 = vmatprep.subr.bf16.mxu0 0
    %299 = vmatpush1.bf16.msra.mxu0 %v281
    %300 = vmatprep.subr.bf16.mxu0 0
    %301 = vmatpush1.bf16.msra.mxu0 %v282
    %302 = vmatprep.subr.bf16.mxu0 0
    %303 = vmatpush1.bf16.msra.mxu0 %v283
    %304 = vmatprep.subr.bf16.mxu0 0
    %305 = vmatpush1.bf16.msra.mxu0 %v284
    %306 = vmatprep.subr.bf16.mxu0 0
    %307 = vmatpush1.bf16.msra.mxu0 %v285
    %308 = vmatprep.subr.bf16.mxu0 0
    %309 = vmatpush1.bf16.msra.mxu0 %v286
    %310 = vmatprep.subr.bf16.mxu0 0
    %311 = vmatpush1.bf16.msra.mxu0 %v287
    %312 = vmatprep.subr.bf16.mxu0 0
    %313 = vmatpush1.bf16.msra.mxu0 0
    %314 = vmatprep.subr.bf16.mxu0 0
    %315 = vmatpush1.bf16.msra.mxu0 0
    %316 = vmatprep.subr.bf16.mxu0 0
    %317 = vmatpush1.bf16.msra.mxu0 0
    %318 = vmatprep.subr.bf16.mxu0 0
    %319 = vmatpush1.bf16.msra.mxu0 0
    %320 = vmatprep.subr.bf16.mxu0 0
    %321 = vmatpush1.bf16.msra.mxu0 0
    %322 = vmatprep.subr.bf16.mxu0 0
    %323 = vmatpush1.bf16.msra.mxu0 0
    %324 = vmatprep.subr.bf16.mxu0 0
    %325 = vmatpush1.bf16.msra.mxu0 0
    %326 = vmatprep.subr.bf16.mxu0 0
    %327 = vmatpush1.bf16.msra.mxu0 0
    %328 = vmatprep.mubr.bf16.mxu0 0
    %329 = vmatmul.mubr.bf16.gmra.mrb[0].mxu0 %v224
    %v330 = vpop.f32.mrb[0].mxu0
    %v331 = vadd.f32 %v246, %v330
    %v332 = vpop.f32.mrb[0].mxu0
    %v333 = vpop.f32.mrb[0].mxu0
    %v334 = vpop.f32.mrb[0].mxu0
    %335 = vdwg.mxu0
    %v336 = vtanh.pop %v331
    %vm337 = vcmask 31744
    %338 = vst.msk [vmem:[%s7] sm:$0xff] %vm337, %v336
    // Predicated region
    $region34: #{tpu_custom_call.1} parent=1 // pred_check
      _
    $region35: #{tpu_custom_call.1} parent=1 // pred_check_branch
      %340 = sbr.rel (0) target = $region37
    $region36: #{tpu_custom_call.1} parent=1 // pred_region
      _
    $region37: #{tpu_custom_call.1} parent=1 // pred_fallthru
      _
    // Predicated region
    $region38: #{tpu_custom_call.1} parent=1 // pred_check
      _
    $region39: #{tpu_custom_call.1} parent=1 // pred_check_branch
      %342 = sbr.rel (0) target = $region41
    $region40: #{tpu_custom_call.1} parent=1 // pred_region
      _
    $region41: #{tpu_custom_call.1} parent=1 // pred_fallthru
      _
    %343 = vsyncpa [#allocation3], 1

</llo_original>
